<compile_context>
chip_gen: v7x
topology: tpu7x:2x2x1
jax: 0.10.0
libtpu: 0.0.40
codegen_flags: <defaults>
</compile_context>

<pallas_src>
import math

import jax
import jax.numpy as jnp
from jax.experimental import pallas as pl
from jax.experimental.pallas import tpu as pltpu

_LANE = 128
_TARGET_BLOCK_BYTES = 4 * 1024 * 1024   # ~4 MiB input blocks (mem-bound sweet spot)
_VMEM_LIMIT_BYTES = 32 * 1024 * 1024    # > v5e's 16 MiB scoped default; fits all gens
# dtype-aware native sublane packing: f32 -> 8 rows, bf16 -> 16, int8/fp8 -> 32
_SUBLANES = {4: 8, 2: 16, 1: 32}


def _drop_sample_kernel(x_ref, s_ref, o_ref):
    # Pure broadcasted multiply.  s_ref is float32, so the product is computed in f32
    # and cast to the output dtype on store.
    o_ref[...] = (x_ref[...] * s_ref[...]).astype(o_ref.dtype)


def drop_sample(x, *, p: float, key, training: bool = True, donate_x: bool = False,
                _target_block_bytes: int = _TARGET_BLOCK_BYTES):
    """Matches DropSample.forward: identity if p == 0 or eval mode; otherwise each
    sample is dropped with probability p and kept samples are scaled by 1/(1-p)."""
    if not p or not training:
        return x

    n = x.shape[0]
    chw = math.prod(x.shape[1:])
    orig_shape = x.shape
    itemsize = jnp.dtype(x.dtype).itemsize
    sub = _SUBLANES.get(itemsize, 8)
    sample_bytes = chw * itemsize
    target = int(_target_block_bytes)

    # Per-sample randomness outside the kernel (plain JAX; no in-kernel PRNG needed).
    # PyTorch: bit_mask = p < rand()  ->  keep iff u > p, scale = 1/(1-p), else 0.
    u = jax.random.uniform(key, (n,), dtype=jnp.float32)
    scale = jnp.where(u > p, 1.0 / (1.0 - p), 0.0)          # stays float32

    if chw % _LANE == 0:
        # Lane-aligned: (n, rows, 128).  Batch dim leads -> no (8,128) constraint on bn.
        rows = chw // _LANE
        x_in = x.reshape(n, rows, _LANE)
        s_in = scale.reshape(n, 1, 1)
        if sample_bytes <= target:
            bn = max(1, min(n, target // max(sample_bytes, 1)))
            if n >= 2:
                bn = min(bn, (n + 1) // 2)   # >= 2 parallel blocks -> feeds both v7x TCs
            row_tile = rows
        else:
            bn = 1
            row_tile = (target // (_LANE * itemsize)) // sub * sub
            row_tile = int(min(rows, max(sub, row_tile)))     # sub-aligned or full rows
        grid = (pl.cdiv(n, bn), pl.cdiv(rows, row_tile))
        x_spec = pl.BlockSpec((bn, row_tile, _LANE), lambda i, j: (i, j, 0))
        s_spec = pl.BlockSpec((bn, 1, 1), lambda i, j: (i, 0, 0))
        out_shape = jax.ShapeDtypeStruct((n, rows, _LANE), x.dtype)
    else:
        # Unaligned CHW: 2D (n, chw).  Block last dim is either the full chw (Mosaic
        # masks the lane tail) or a 128-lane multiple -> no pad/slice HBM round trips.
        x_in = x.reshape(n, chw)
        s_in = scale.reshape(n, 1)
        bn_fit = max(1, target // max(sample_bytes, 1))
        if n <= sub:
            bn = n                                   # equals full batch dim (always legal)
        elif bn_fit >= sub:
            bn = min(bn_fit, (n + 1) // 2)           # >= 2 parallel sample blocks (v7x)
            bn = max(sub, bn // sub * sub)           # dtype-aware sublane alignment
        else:
            bn = sub                                 # samples too big to batch further
        if bn * sample_bytes > target and chw > _LANE:
            col_tile = (target // (bn * itemsize)) // _LANE * _LANE
            col_tile = int(min(chw, max(_LANE, col_tile)))    # 128-multiple or full chw
        else:
            col_tile = chw
        grid = (pl.cdiv(n, bn), pl.cdiv(chw, col_tile))
        x_spec = pl.BlockSpec((bn, col_tile), lambda i, j: (i, j))
        s_spec = pl.BlockSpec((bn, 1), lambda i, j: (i, 0))
        out_shape = jax.ShapeDtypeStruct((n, chw), x.dtype)

    out = pl.pallas_call(
        _drop_sample_kernel,
        out_shape=out_shape,
        grid=grid,
        in_specs=[x_spec, s_spec],
        out_specs=x_spec,
        # In-place scaling only when the caller explicitly donates x; otherwise XLA
        # would insert a defensive copy that erases the intended bandwidth saving.
        input_output_aliases={0: 0} if donate_x else {},
        compiler_params=pltpu.CompilerParams(
            dimension_semantics=("parallel", "parallel"),
            vmem_limit_bytes=_VMEM_LIMIT_BYTES,
        ),
    )(x_in, s_in)

    return out.reshape(orig_shape)


if __name__ == "__main__":
    key = jax.random.PRNGKey(0)
    kx, kd, kx2, kx3, kx4 = jax.random.split(key, 5)

    def ref_drop(x, p, dkey):
        u = jax.random.uniform(dkey, (x.shape[0],), dtype=jnp.float32)
        s = jnp.where(u > p, 1.0 / (1.0 - p), 0.0)
        return (x * s.reshape((-1,) + (1,) * (x.ndim - 1))).astype(x.dtype)

    def check(x, p, dkey, **kw):
        y = jax.block_until_ready(drop_sample(x, p=p, key=dkey, training=True, **kw))
        r = ref_drop(x, p, dkey)
        assert y.shape == x.shape and y.dtype == x.dtype
        assert bool(jnp.allclose(y, r, rtol=1e-6, atol=1e-6)), "mismatch vs reference"
        for b in range(x.shape[0]):
            yb = y[b]
            dropped = bool(jnp.all(yb == 0))
            kept = bool(jnp.allclose(yb, x[b] / (1.0 - p), rtol=1e-6, atol=1e-6))
            assert dropped or kept, "sample neither fully dropped nor correctly rescaled"

    # 1) Main case: CHW % 128 == 0, lane-dense (n, rows, 128), >= 2 parallel blocks.
    x = jax.random.normal(kx, (2, 4, 16, 16), dtype=jnp.float32)
    check(x, 0.25, kd)

    # 2) Unaligned CHW, tiny batch: 2D path, full-chw block, masked lane tail (no pad).
    x_odd = jax.random.normal(kx2, (2, 3, 5, 7), dtype=jnp.float32)
    check(x_odd, 0.5, kd)

    # 3) Unaligned CHW, batch > sublane group: sublane-aligned sample batching.
    x_b = jax.random.normal(kx3, (16, 3, 5, 7), dtype=jnp.float32)
    check(x_b, 0.25, kd)

    # 4) Row-tiled large-sample branch (exercised with a shrunken block target).
    x_big = jax.random.normal(kx4, (2, 8, 16, 16), dtype=jnp.float32)
    check(x_big, 0.25, kd, _target_block_bytes=4096)

    # 5) Column-tiled unaligned branch + opt-in in-place (aliased) variant.
    x_c = jax.random.normal(kx, (2, 3, 10, 13), dtype=jnp.float32)
    check(x_c, 0.25, kd, _target_block_bytes=512, donate_x=True)

    # Eval mode / p == 0 passthrough.
    assert bool(jnp.all(drop_sample(x, p=0.25, key=kd, training=False) == x))
    assert bool(jnp.all(drop_sample(x, p=0.0, key=kd, training=True) == x))

    print("KERNEL_OK")
</pallas_src>

<mosaic_0001>
module attributes {stable_mosaic.version = 11 : i64} {
  func.func @_drop_sample_kernel(%arg0: i32, %arg1: i32, %arg2: memref<1x8x128xf32, #tpu.memory_space<vmem>>, %arg3: memref<1x1x1xf32, #tpu.memory_space<vmem>>, %arg4: memref<1x8x128xf32, #tpu.memory_space<vmem>>) attributes {dimension_semantics = [#tpu.dimension_semantics<parallel>, #tpu.dimension_semantics<parallel>], iteration_bounds = array<i64: 2, 1>, scalar_prefetch = 0 : i64, scratch_operands = 0 : i64, tpu.core_type = #tpu.core_type<tc>, window_params = [{transform_indices = @transform_0, window_bounds = array<i64: 1, 8, 128>}, {transform_indices = @transform_1, window_bounds = array<i64: 1, 1, 1>}, {transform_indices = @transform_2, window_bounds = array<i64: 1, 8, 128>}]} {
    %c0 = arith.constant 0 : index
    %c0_0 = arith.constant 0 : index
    %c0_1 = arith.constant 0 : index
    %0 = vector.load %arg2[%c0, %c0_0, %c0_1] : memref<1x8x128xf32, #tpu.memory_space<vmem>>, vector<1x8x128xf32>
    %c0_2 = arith.constant 0 : index
    %c0_3 = arith.constant 0 : index
    %c0_4 = arith.constant 0 : index
    %1 = vector.load %arg3[%c0_2, %c0_3, %c0_4] : memref<1x1x1xf32, #tpu.memory_space<vmem>>, vector<1x1x1xf32>
    %2 = vector.broadcast %1 : vector<1x1x1xf32> to vector<1x8x128xf32>
    %3 = arith.mulf %0, %2 : vector<1x8x128xf32>
    %c0_5 = arith.constant 0 : index
    %c0_6 = arith.constant 0 : index
    %c0_7 = arith.constant 0 : index
    %4 = vector.load %arg4[%c0_5, %c0_6, %c0_7] : memref<1x8x128xf32, #tpu.memory_space<vmem>>, vector<1x8x128xf32>
    tpu.vector_store %arg4[%c0_5, %c0_6, %c0_7], %3 {strides = array<i32>} : memref<1x8x128xf32, #tpu.memory_space<vmem>>, vector<1x8x128xf32>,
    return
  }
  func.func @transform_0(%arg0: i32, %arg1: i32) -> (i32, i32, i32) {
    %c0_i32 = arith.constant 0 : i32
    %c0_i32_0 = arith.constant 0 : i32
    return %arg0, %arg1, %c0_i32 : i32, i32, i32
  }
  func.func @transform_1(%arg0: i32, %arg1: i32) -> (i32, i32, i32) {
    %c0_i32 = arith.constant 0 : i32
    %c0_i32_0 = arith.constant 0 : i32
    %c0_i32_1 = arith.constant 0 : i32
    return %arg0, %c0_i32, %c0_i32_0 : i32, i32, i32
  }
  func.func @transform_2(%arg0: i32, %arg1: i32) -> (i32, i32, i32) {
    %c0_i32 = arith.constant 0 : i32
    %c0_i32_0 = arith.constant 0 : i32
    return %arg0, %arg1, %c0_i32 : i32, i32, i32
  }
}

</mosaic_0001>

<llo_original>
// kernel: tpu_custom_call.1
$region0: #{tpu_custom_call.1}
  #allocation0 [shape = 'u32[]', space=smem, size = 0x4, offset = 0x4, fixed_abs, tag = 'smem constant byte address 0x4 - core index']
  #allocation1 [shape = 'u32[144,128]{1,0:T(1,128)}', space=vmem, size = 0x12000, scoped, tag = 'internal scratch']
  %s0 = inlined_call_operand.hbm [shape: f32[2,8,128], index: 0, kind: input, shape index: {}]
  %s1 = inlined_call_operand.vmem [shape: f32[2,1,1], index: 1, kind: input, shape index: {}]
  %s2 = inlined_call_operand.hbm [shape: f32[2,8,128], index: 2, kind: output, shape index: {}]
  %s3 = sld [smem:[#allocation0]]
  $region45: #{tpu_custom_call.1} parent=0
    _
  %s5 = ssub.s32 1, %s3
  %s6 = scalar_select 0, %s5, %s3
  $region1: #{tpu_custom_call.1} parent=0
    #allocation2 [shape = 'u8[8192]{0}', space=vmem, size = 0x2000, scoped, tag = 'input window, operand 0']
    #allocation3 [shape = 's32[2]{0}', space=sflag, size = 0x8, scoped, tag = 'scoped memory for tpu_custom_call.1']
    #allocation4 [shape = 's32[2]{0}', space=sflag, size = 0x8, scoped, tag = 'scoped memory for tpu_custom_call.1']
    #allocation5 [shape = 'u8[8192]{0}', space=vmem, size = 0x2000, scoped, tag = 'output window, operand 0']
    %7 = vsyncpa [#allocation3], 0
    %s8 = scalar_lea.sflag [#allocation3], 1
    %9 = vsyncpa %s8, 0
    %10 = vsyncpa [#allocation4], 0
    %s11 = scalar_lea.sflag [#allocation4], 1
    %12 = vsyncpa %s11, 0
    loop: start=0, step=1, limit=4
    $region2: #{tpu_custom_call.1} parent=1 // loop_pre_header
      _
    $region3: #{tpu_custom_call.1} parent=1 // loop_header
      %s14 = sphi 0, %s18
      %p15 = scmp.ge.s32.totalorder %s14, 4
      %s21 = sphi 0, %s33
      %s22 = sphi 0, %s29
      %s23 = sphi 0, %s21
      %s24 = sphi 0, %s22
      %s25 = sphi 0, %s23
      %s26 = sphi 0, %s24
      %s38 = sphi 0, %s40
      %s41 = sphi 0, %s38
      %s42 = sphi 0, %s41
      %s58 = sphi 0, %s42
      %s64 = sphi 0, %s66
      %s67 = sphi 0, %s64
      %s68 = sphi 0, %s67
      %s84 = sphi 0, %s68
      %s92 = sphi 0, %s94
      %s95 = sphi 0, %s92
      %s96 = sphi 0, %s95
      %s112 = sphi 0, %s96
    $region4: #{tpu_custom_call.1} parent=1 // loop_header_branch
      %17 = sbr.rel (%p15) target = $region8
    $region5: #{tpu_custom_call.1} parent=1 // loop_body
      %s19 = ssub.s32 %s14, 1
      %s20 = ssub.s32 %s14, 2
      %s27 = sadd.s32 1, %s22
      %p28 = scmp.ge.s32.totalorder %s27, 1
      %s29 = scalar_select %p28, 0, %s27
      %s30 = sadd.s32 1, %s21
      %s31 = scalar_select %p28, %s30, %s21
      %p32 = scmp.ge.s32.totalorder %s31, 2
      %s33 = scalar_select %p32, 0, %s31
      %s34 = ssub.s32 %s21, %s33
      %s35 = ssub.s32 %s22, %s29
      %s36 = sor.u32 %s34, %s35
      %p37 = scmp.eq.s32.totalorder %s36, 0
      %s39 = sadd.s32 %s38, 1
      %s40 = scalar_select %p37, %s38, %s39
      %p43 = pneg %p37
      %p44 = scmp.eq.s32.totalorder %s14, 1
      %p45 = por %p43, %p44
      %p46 = scmp.ne.s32.totalorder %s38, %s41
      %p47 = scmp.eq.s32.totalorder %s14, 0
      %p48 = por %p46, %p47
      %p49 = scmp.ne.s32.totalorder %s38, %s41
      %p50 = scmp.eq.s32.totalorder %s19, 1
      %p51 = por %p49, %p50
      %p52 = scmp.ne.s32.totalorder %s41, %s42
      %p53 = scmp.eq.s32.totalorder %s19, 0
      %p54 = por %p52, %p53
      %p55 = scmp.ne.s32.totalorder %s41, %s42
      %p56 = scmp.eq.s32.totalorder %s20, 1
      %p57 = por %p55, %p56
      %p59 = scmp.ne.s32.totalorder %s42, %s58
      %p60 = scmp.eq.s32.totalorder %s20, 0
      %p61 = por %p59, %p60
      %s62 = ssub.s32 %s21, %s33
      %p63 = scmp.eq.s32.totalorder %s62, 0
      %s65 = sadd.s32 %s64, 1
      %s66 = scalar_select %p63, %s64, %s65
      %p69 = pneg %p63
      %p70 = scmp.eq.s32.totalorder %s14, 1
      %p71 = por %p69, %p70
      %p72 = scmp.ne.s32.totalorder %s64, %s67
      %p73 = scmp.eq.s32.totalorder %s14, 0
      %p74 = por %p72, %p73
      %p75 = scmp.ne.s32.totalorder %s64, %s67
      %p76 = scmp.eq.s32.totalorder %s19, 1
      %p77 = por %p75, %p76
      %p78 = scmp.ne.s32.totalorder %s67, %s68
      %p79 = scmp.eq.s32.totalorder %s19, 0
      %p80 = por %p78, %p79
      %p81 = scmp.ne.s32.totalorder %s67, %s68
      %p82 = scmp.eq.s32.totalorder %s20, 1
      %p83 = por %p81, %p82
      %p85 = scmp.ne.s32.totalorder %s68, %s84
      %p86 = scmp.eq.s32.totalorder %s20, 0
      %p87 = por %p85, %p86
      %s88 = ssub.s32 %s21, %s33
      %s89 = ssub.s32 %s22, %s29
      %s90 = sor.u32 %s88, %s89
      %p91 = scmp.eq.s32.totalorder %s90, 0
      %s93 = sadd.s32 %s92, 1
      %s94 = scalar_select %p91, %s92, %s93
      %p97 = pneg %p91
      %p98 = scmp.eq.s32.totalorder %s14, 1
      %p99 = por %p97, %p98
      %p100 = scmp.ne.s32.totalorder %s92, %s95
      %p101 = scmp.eq.s32.totalorder %s14, 0
      %p102 = por %p100, %p101
      %p103 = scmp.ne.s32.totalorder %s92, %s95
      %p104 = scmp.eq.s32.totalorder %s19, 1
      %p105 = por %p103, %p104
      %p106 = scmp.ne.s32.totalorder %s95, %s96
      %p107 = scmp.eq.s32.totalorder %s19, 0
      %p108 = por %p106, %p107
      %p109 = scmp.ne.s32.totalorder %s95, %s96
      %p110 = scmp.eq.s32.totalorder %s20, 1
      %p111 = por %p109, %p110
      %p113 = scmp.ne.s32.totalorder %s96, %s112
      %p114 = scmp.eq.s32.totalorder %s20, 0
      %p115 = por %p113, %p114
      %p116 = scmp.le.s32.totalorder 1, %s14
      %p117 = scmp.lt.s32.totalorder %s14, 3
      %p118 = pnand %p116, %p117
      %p119 = pneg %p118
      // Predicated region
      $region9: #{tpu_custom_call.1} parent=5 // pred_check
        _
      $region10: #{tpu_custom_call.1} parent=5 // pred_check_branch
        %121 = sbr.rel (%p118) target = $region12
      $region11: #{tpu_custom_call.1} parent=5 // pred_region
        %s122 = ssub.s32 %s14, 1
      $region12: #{tpu_custom_call.1} parent=5 // pred_fallthru
        _
      %p123 = scmp.lt.s32.totalorder %s14, 2
      // Predicated region
      $region13: #{tpu_custom_call.1} parent=5 // pred_check
        %p124 = pneg %p123
      $region14: #{tpu_custom_call.1} parent=5 // pred_check_branch
        %126 = sbr.rel (%p124) target = $region16
      $region15: #{tpu_custom_call.1} parent=5 // pred_region
        // Predicated region
        $region17: #{tpu_custom_call.1} parent=15 // pred_check
          %p127 = pneg %p48
        $region18: #{tpu_custom_call.1} parent=15 // pred_check_branch
          %129 = sbr.rel (%p127) target = $region20
        $region19: #{tpu_custom_call.1} parent=15 // pred_region
          %s130 = sand.u32 %s38, 1
          %s131 = scalar_lea.sflag [#allocation3], %s130
          %s132 = sand.u32 %s38, 1
          %s133 = smul.addr %s132, 8
          %s134 = scalar_lea.vmem [#allocation2], %s133
          %s136 = ssub.s32 128, 128
          %137 = vsyncadd %s131, %s136
          %s138 = sadd.s32 %s22, %s21
          %s139 = smul.addr %s138, 128
          %s140 = scalar_lea.hbm %s0, %s139
          %s142 = sshll.u32 %s134, 4
          %s143 = int_to_ptr.vmem [resolvable:$true] %s142
          %145 = dma.hbm_to_vmem [thread:$0]  %s140, 128, %s143, %s131
        $region20: #{tpu_custom_call.1} parent=15 // pred_fallthru
          _
        // Predicated region
        $region21: #{tpu_custom_call.1} parent=15 // pred_check
          %p146 = pneg %p74
        $region22: #{tpu_custom_call.1} parent=15 // pred_check_branch
          %148 = sbr.rel (%p146) target = $region24
        $region23: #{tpu_custom_call.1} parent=15 // pred_region
          %p149 = scmp.lt.s32.totalorder %s21, 1
          %s150 = scalar_select %p149, %s21, 1
          %s151 = scalar_lea.vmem %s1, %s150
        $region24: #{tpu_custom_call.1} parent=15 // pred_fallthru
          _
      $region16: #{tpu_custom_call.1} parent=5 // pred_fallthru
        _
      %p152 = scmp.le.s32.totalorder 1, %s14
      %p153 = scmp.lt.s32.totalorder %s14, 3
      %p154 = pnand %p152, %p153
      %p155 = pneg %p154
      // Predicated region
      $region25: #{tpu_custom_call.1} parent=5 // pred_check
        _
      $region26: #{tpu_custom_call.1} parent=5 // pred_check_branch
        %157 = sbr.rel (%p154) target = $region28
      $region27: #{tpu_custom_call.1} parent=5 // pred_region
        %s158 = ssub.s32 %s14, 1
        %s159 = sand.u32 %s41, 1
        %s160 = scalar_lea.sflag [#allocation3], %s159
        %s161 = sand.u32 %s41, 1
        %s162 = smul.addr %s161, 8
        %s163 = scalar_lea.vmem [#allocation2], %s162
        // Predicated region
        $region29: #{tpu_custom_call.1} parent=27 // pred_check
          %p164 = pneg %p54
        $region30: #{tpu_custom_call.1} parent=27 // pred_check_branch
          %166 = sbr.rel (%p164) target = $region32
        $region31: #{tpu_custom_call.1} parent=27 // pred_region
          %167 = dma.done %s160, 128
        $region32: #{tpu_custom_call.1} parent=27 // pred_fallthru
          _
        %s168 = sand.u32 %s41, 1
        %s169 = scalar_lea.sflag [#allocation3], %s168
        %s170 = sand.u32 %s41, 1
        %s171 = smul.addr %s170, 8
        %s172 = scalar_lea.vmem [#allocation2], %s171
        %p173 = pneg %p54
        %p174 = pneg %p51
        %p175 = scmp.lt.s32.totalorder %s23, 1
        %s176 = scalar_select %p175, %s23, 1
        %s177 = scalar_lea.vmem %s1, %s176
        %p178 = pneg %p80
        %p179 = pneg %p77
        %p180 = pneg %p108
        %p181 = pneg %p105
        %s182 = sand.u32 %s95, 1
        %s183 = scalar_lea.sflag [#allocation4], %s182
        %s184 = sand.u32 %s95, 1
        %s185 = smul.addr %s184, 8
        %s186 = scalar_lea.vmem [#allocation5], %s185
        %p187 = scmp.lt.s32.totalorder %s23, 1
        %s188 = scalar_select %p187, %s23, 1
        %s189 = scalar_lea.vmem %s1, %s188
        %v190 = vld [vmem:[%s163] sm:$0xff]
        %v191 = vld [vmem:[%s189] sm:$0x1]
        %v193 = vlaneseq
        %v194 = vshrl.u32 %v193, 7
        %v195 = vsub.s32 0, %v194
        %v196 = vrot.slane %v191, %v195
        %197 = vset.pattern.permute.xlu0 0
        %198 = vperm.xlu0 %197, %v196
        %v199 = vpop.permute.xlu0 %198
        %v201 = vmul.f32 %v190, %v199
        %202 = vst [vmem:[%s186] sm:$0xff] %v201
        %s203 = sand.u32 %s95, 1
        %s204 = scalar_lea.sflag [#allocation4], %s203
        %s205 = sand.u32 %s95, 1
        %s206 = smul.addr %s205, 8
        %s207 = scalar_lea.vmem [#allocation5], %s206
        // Predicated region
        $region33: #{tpu_custom_call.1} parent=27 // pred_check
          %p208 = pneg %p105
        $region34: #{tpu_custom_call.1} parent=27 // pred_check_branch
          %210 = sbr.rel (%p208) target = $region36
        $region35: #{tpu_custom_call.1} parent=27 // pred_region
          %s212 = ssub.s32 128, 128
          %213 = vsyncadd %s204, %s212
          %s214 = sadd.s32 %s24, %s23
          %s215 = smul.addr %s214, 128
          %s216 = scalar_lea.hbm %s2, %s215
          %s218 = sshll.u32 %s207, 4
          %s219 = int_to_ptr.vmem [resolvable:$true] %s218
          %221 = dma.vmem_to_hbm [thread:$0]  %s219, 128, %s216, %s204
        $region36: #{tpu_custom_call.1} parent=27 // pred_fallthru
          _
      $region28: #{tpu_custom_call.1} parent=5 // pred_fallthru
        _
      %p222 = scmp.le.s32.totalorder 2, %s14
      // Predicated region
      $region37: #{tpu_custom_call.1} parent=5 // pred_check
        %p223 = pneg %p222
      $region38: #{tpu_custom_call.1} parent=5 // pred_check_branch
        %225 = sbr.rel (%p223) target = $region40
      $region39: #{tpu_custom_call.1} parent=5 // pred_region
        %s226 = ssub.s32 %s14, 2
        // Predicated region
        $region41: #{tpu_custom_call.1} parent=39 // pred_check
          %p227 = pneg %p111
        $region42: #{tpu_custom_call.1} parent=39 // pred_check_branch
          %229 = sbr.rel (%p227) target = $region44
        $region43: #{tpu_custom_call.1} parent=39 // pred_region
          %s230 = sand.u32 %s96, 1
          %s231 = scalar_lea.sflag [#allocation4], %s230
          %s232 = sand.u32 %s96, 1
          %s233 = smul.addr %s232, 8
          %s234 = scalar_lea.vmem [#allocation5], %s233
          %235 = dma.done %s231, 128
        $region44: #{tpu_custom_call.1} parent=39 // pred_fallthru
          _
      $region40: #{tpu_custom_call.1} parent=5 // pred_fallthru
        _
    $region6: #{tpu_custom_call.1} parent=1 // loop_footer
      %s18 = sadd.s32 1, %s14
    $region7: #{tpu_custom_call.1} parent=1 // loop_footer_branch
      %13 = sbr.rel target = $region3
    $region8: #{tpu_custom_call.1} parent=1 // loop_exit
      _
    %236 = vsyncpa [#allocation3], 1
    %s237 = scalar_lea.sflag [#allocation3], 1
    %238 = vsyncpa %s237, 1
    %239 = vsyncpa [#allocation4], 1
    %s240 = scalar_lea.sflag [#allocation4], 1
    %241 = vsyncpa %s240, 1

</llo_original>
